<compile_context>
chip_gen: v7x
topology: tpu7x:2x2x1
jax: 0.10.0
libtpu: 0.0.40
codegen_flags: <defaults>
</compile_context>

<pallas_src>
import jax
import jax.numpy as jnp
from jax.experimental import pallas as pl
from jax.experimental.pallas import tpu as pltpu


def _round_up(x, m):
    return ((x + m - 1) // m) * m


def _emd_partial_kernel(pt_ref, pe_ref, tri_ref, out_ref):
    # cumsum is linear: cumsum(pe) - cumsum(pt) == cumsum(pe - pt).
    d = pe_ref[...] - pt_ref[...]                              # (TB, N) f32, VPU
    # Cumsum along bins as a matmul with the resident upper-triangular ones
    # matrix U (U[k, j] = 1 for k <= j): (d @ U)[b, j] = sum_{k<=j} d[b, k].
    cdf_diff = jnp.dot(d, tri_ref[...], preferred_element_type=jnp.float32)
    # Per-tile partial sum of squares; global mean + sqrt are finished in the
    # wrapper so this grid axis stays fully "parallel".
    out_ref[0, 0] = jnp.sum(cdf_diff * cdf_diff)


def _choose_batch_tile(B, N):
    """Largest batch tile (multiple of 8) that keeps VMEM usage ~<= 24 MiB."""
    budget = 24 * 1024 * 1024
    tri_bytes = 2 * N * N * 4                 # resident tri (x2 buffering headroom)
    avail = max(budget - tri_bytes, 2 * 1024 * 1024)
    tb = avail // (4 * N * 4)                 # 2 inputs x 2 buffers, 4 B/elem
    tb = max(8, min(1024, (tb // 8) * 8))
    tb = min(tb, _round_up(B, 8))             # don't over-pad small batches
    return tb


def emd_loss(p_target, p_estimate, *, block_rows=None):
    assert p_target.shape == p_estimate.shape
    assert p_target.ndim == 2, "kernel expects (B, N) with cumsum along dim 1"
    B, N = p_target.shape

    pt = p_target.astype(jnp.float32)
    pe = p_estimate.astype(jnp.float32)

    tb = _choose_batch_tile(B, N) if block_rows is None else block_rows
    tb = max(8, (tb // 8) * 8)                # sublane-aligned tile
    b_pad = _round_up(B, tb)
    if b_pad != B:
        # Zero rows give cdf_diff == 0 and contribute nothing to the sum.
        pad = ((0, b_pad - B), (0, 0))
        pt = jnp.pad(pt, pad)
        pe = jnp.pad(pe, pad)
    num_blocks = b_pad // tb

    # Loop-invariant upper-triangular ones matrix, DMA'd once and kept
    # resident in VMEM via the constant index_map.
    tri = jnp.triu(jnp.ones((N, N), dtype=jnp.float32))

    partials = pl.pallas_call(
        _emd_partial_kernel,
        out_shape=jax.ShapeDtypeStruct((num_blocks, 1), jnp.float32),
        grid=(num_blocks,),
        in_specs=[
            pl.BlockSpec((tb, N), lambda i: (i, 0)),
            pl.BlockSpec((tb, N), lambda i: (i, 0)),
            pl.BlockSpec((N, N), lambda i: (0, 0)),   # resident across grid
        ],
        out_specs=pl.BlockSpec((1, 1), lambda i: (i, 0),
                               memory_space=pltpu.SMEM),
        compiler_params=pltpu.CompilerParams(
            dimension_semantics=("parallel",),
            vmem_limit_bytes=32 * 1024 * 1024,
        ),
    )(pt, pe, tri)

    # Finish the reduction in f32 outside the kernel (per-tile partials summed
    # here avoid a single long-running scalar accumulator) over the ORIGINAL
    # element count.
    total = jnp.sum(partials)
    return jnp.sqrt(total / jnp.float32(B * N))


def _emd_loss_ref(p_target, p_estimate):
    cdf_t = jnp.cumsum(p_target, axis=1)
    cdf_e = jnp.cumsum(p_estimate, axis=1)
    diff = cdf_e - cdf_t
    return jnp.sqrt(jnp.mean(jnp.abs(diff) ** 2))


if __name__ == "__main__":
    key = jax.random.PRNGKey(0)
    k1, k2, k3, k4 = jax.random.split(key, 4)

    # Case 1: NIMA / ViLT-style normalized score distributions, single tile.
    B1, N1 = 8, 16
    pt1 = jax.nn.softmax(jax.random.normal(k1, (B1, N1), jnp.float32), axis=1)
    pe1 = jax.nn.softmax(jax.random.normal(k2, (B1, N1), jnp.float32), axis=1)
    out1 = jax.block_until_ready(emd_loss(pt1, pe1))
    ref1 = _emd_loss_ref(pt1, pe1)
    assert jnp.allclose(out1, ref1, rtol=1e-5, atol=1e-6), (out1, ref1)

    # Case 2: multi-block grid path (B not a multiple of the tile) — exercises
    # batch tiling, zero-padding, and per-block partial sums.
    B2, N2 = 36, 16
    pt2 = jax.nn.softmax(jax.random.normal(k3, (B2, N2), jnp.float32), axis=1)
    pe2 = jax.nn.softmax(jax.random.normal(k4, (B2, N2), jnp.float32), axis=1)
    out2 = jax.block_until_ready(emd_loss(pt2, pe2, block_rows=16))
    ref2 = _emd_loss_ref(pt2, pe2)
    assert jnp.allclose(out2, ref2, rtol=1e-5, atol=1e-6), (out2, ref2)

    print("KERNEL_OK")
</pallas_src>

<mosaic_0001>
module attributes {stable_mosaic.version = 11 : i64} {
  func.func @_emd_partial_kernel(%arg0: i32, %arg1: memref<8x16xf32, #tpu.memory_space<vmem>>, %arg2: memref<8x16xf32, #tpu.memory_space<vmem>>, %arg3: memref<16x16xf32, #tpu.memory_space<vmem>>, %arg4: memref<1x1xf32, #tpu.memory_space<smem>>) attributes {dimension_semantics = [#tpu.dimension_semantics<parallel>], iteration_bounds = array<i64: 1>, scalar_prefetch = 0 : i64, scratch_operands = 0 : i64, tpu.core_type = #tpu.core_type<tc>, window_params = [{transform_indices = @transform_0, window_bounds = array<i64: 8, 16>}, {transform_indices = @transform_1, window_bounds = array<i64: 8, 16>}, {pipeline_mode = #tpu.pipeline_mode<synchronous>, transform_indices = @transform_2, window_bounds = array<i64: 16, 16>}, {transform_indices = @transform_3, window_bounds = array<i64: 1, 1>}]} {
    %c0 = arith.constant 0 : index
    %c0_0 = arith.constant 0 : index
    %0 = vector.load %arg2[%c0, %c0_0] : memref<8x16xf32, #tpu.memory_space<vmem>>, vector<8x16xf32>
    %c0_1 = arith.constant 0 : index
    %c0_2 = arith.constant 0 : index
    %1 = vector.load %arg1[%c0_1, %c0_2] : memref<8x16xf32, #tpu.memory_space<vmem>>, vector<8x16xf32>
    %2 = arith.subf %0, %1 : vector<8x16xf32>
    %c0_3 = arith.constant 0 : index
    %c0_4 = arith.constant 0 : index
    %3 = vector.load %arg3[%c0_3, %c0_4] : memref<16x16xf32, #tpu.memory_space<vmem>>, vector<16x16xf32>
    %cst = arith.constant dense<0.000000e+00> : vector<8x16xf32>
    %4 = tpu.matmul %2, %3, %cst {dimension_numbers = #tpu.dot_dimension_numbers<[1], [0], [0], [1], [0, 0, 1, 1], [], []>} : vector<8x16xf32>, vector<16x16xf32>, vector<8x16xf32> -> vector<8x16xf32>
    %5 = arith.mulf %4, %4 : vector<8x16xf32>
    %6 = vector.shape_cast %5 : vector<8x16xf32> to vector<1x8x16xf32>
    %cst_5 = arith.constant dense<0.000000e+00> : vector<1xf32>
    %7 = vector.multi_reduction <add>, %6, %cst_5 [1, 2] : vector<1x8x16xf32> to vector<1xf32>
    %8 = vector.shape_cast %7 : vector<1xf32> to vector<1x1x1xf32>
    %9 = vector.extract %8[0, 0, 0] : f32 from vector<1x1x1xf32>
    %c0_6 = arith.constant 0 : index
    %c0_7 = arith.constant 0 : index
    %10 = memref.load %arg4[%c0_6, %c0_7] : memref<1x1xf32, #tpu.memory_space<smem>>
    memref.store %9, %arg4[%c0_6, %c0_7] : memref<1x1xf32, #tpu.memory_space<smem>>
    return
  }
  func.func @transform_0(%arg0: i32) -> (i32, i32) {
    %c0_i32 = arith.constant 0 : i32
    %c0_i32_0 = arith.constant 0 : i32
    return %arg0, %c0_i32 : i32, i32
  }
  func.func @transform_1(%arg0: i32) -> (i32, i32) {
    %c0_i32 = arith.constant 0 : i32
    %c0_i32_0 = arith.constant 0 : i32
    return %arg0, %c0_i32 : i32, i32
  }
  func.func @transform_2(%arg0: i32) -> (i32, i32) {
    %c0_i32 = arith.constant 0 : i32
    %c0_i32_0 = arith.constant 0 : i32
    %c0_i32_1 = arith.constant 0 : i32
    return %c0_i32, %c0_i32_0 : i32, i32
  }
  func.func @transform_3(%arg0: i32) -> (i32, i32) {
    %c0_i32 = arith.constant 0 : i32
    %c0_i32_0 = arith.constant 0 : i32
    return %arg0, %c0_i32 : i32, i32
  }
}

</mosaic_0001>

<llo_original>
// kernel: tpu_custom_call.1
$region0: #{tpu_custom_call.1}
  #allocation0 [shape = 'u32[]', space=smem, size = 0x4, offset = 0x4, fixed_abs, tag = 'smem constant byte address 0x4 - core index']
  #allocation1 [shape = 'u32[144,128]{1,0:T(1,128)}', space=vmem, size = 0x12000, scoped, tag = 'internal scratch']
  %s0 = inlined_call_operand.hbm [shape: f32[8,16], index: 0, kind: input, shape index: {}]
  %s1 = inlined_call_operand.hbm [shape: f32[8,16], index: 1, kind: input, shape index: {}]
  %s2 = inlined_call_operand.hbm [shape: f32[16,16], index: 2, kind: input, shape index: {}]
  %s3 = inlined_call_operand.hbm [shape: f32[1,1], index: 3, kind: output, shape index: {}]
  %s4 = sld [smem:[#allocation0]]
  $region34: #{tpu_custom_call.1} parent=0
    _
  %s6 = ssub.s32 1, %s4
  %s7 = scalar_select 0, %s6, %s4
  $region1: #{tpu_custom_call.1} parent=0
    #allocation2 [shape = 'u8[4096]{0}', space=vmem, size = 0x1000, scoped, tag = 'input window, operand 0, single buffered']
    #allocation3 [shape = 's32[1]{0}', space=sflag, size = 0x4, scoped, tag = 'scoped memory for tpu_custom_call.1']
    #allocation4 [shape = 's32[1]{0}', space=sflag, size = 0x4, scoped, tag = 'scoped memory for tpu_custom_call.1']
    #allocation5 [shape = 'u8[4096]{0}', space=vmem, size = 0x1000, scoped, tag = 'input window, operand 1, single buffered']
    #allocation6 [shape = 's32[1]{0}', space=sflag, size = 0x4, scoped, tag = 'scoped memory for tpu_custom_call.1']
    #allocation7 [shape = 'u8[8192]{0}', space=vmem, size = 0x2000, scoped, tag = 'input window, operand 2, single buffered']
    #allocation8 [shape = 'u8[512]{0}', space=smem, size = 0x200, scoped, tag = 'output window, operand 0, single buffered']
    %8 = vsyncpa [#allocation3], 0
    %9 = vsyncpa [#allocation6], 0
    %10 = vsyncpa [#allocation4], 0
    // Predicated region
    $region2: #{tpu_custom_call.1} parent=1 // pred_check
      _
    $region3: #{tpu_custom_call.1} parent=1 // pred_check_branch
      %12 = sbr.rel (0) target = $region5
    $region4: #{tpu_custom_call.1} parent=1 // pred_region
      %s14 = ssub.s32 128, 128
      %15 = vsyncadd [#allocation3], %s14
      %s17 = sshll.u32 [#allocation2], 4
      %s18 = int_to_ptr.vmem [resolvable:$true] %s17
      %20 = dma.hbm_to_vmem [thread:$0]  %s0, 128, %s18, [#allocation3]
    $region5: #{tpu_custom_call.1} parent=1 // pred_fallthru
      _
    // Predicated region
    $region6: #{tpu_custom_call.1} parent=1 // pred_check
      _
    $region7: #{tpu_custom_call.1} parent=1 // pred_check_branch
      %22 = sbr.rel (0) target = $region9
    $region8: #{tpu_custom_call.1} parent=1 // pred_region
      %s24 = ssub.s32 128, 128
      %25 = vsyncadd [#allocation6], %s24
      %s27 = sshll.u32 [#allocation5], 4
      %s28 = int_to_ptr.vmem [resolvable:$true] %s27
      %30 = dma.hbm_to_vmem [thread:$0]  %s1, 128, %s28, [#allocation6]
    $region9: #{tpu_custom_call.1} parent=1 // pred_fallthru
      _
    // Predicated region
    $region10: #{tpu_custom_call.1} parent=1 // pred_check
      _
    $region11: #{tpu_custom_call.1} parent=1 // pred_check_branch
      %32 = sbr.rel (0) target = $region13
    $region12: #{tpu_custom_call.1} parent=1 // pred_region
      %s34 = ssub.s32 256, 256
      %35 = vsyncadd [#allocation6], %s34
      %s36 = sshll.u32 [#allocation7], 4
      %s37 = int_to_ptr.vmem [resolvable:$true] %s36
      %42 = dma.hbm_to_vmem [thread:$0]  %s2, 256, %s37, [#allocation6], 128, 128, 8
    $region13: #{tpu_custom_call.1} parent=1 // pred_fallthru
      _
    // Predicated region
    $region14: #{tpu_custom_call.1} parent=1 // pred_check
      _
    $region15: #{tpu_custom_call.1} parent=1 // pred_check_branch
      %44 = sbr.rel (0) target = $region17
    $region16: #{tpu_custom_call.1} parent=1 // pred_region
      %45 = dma.done [#allocation3], 128
    $region17: #{tpu_custom_call.1} parent=1 // pred_fallthru
      _
    // Predicated region
    $region18: #{tpu_custom_call.1} parent=1 // pred_check
      _
    $region19: #{tpu_custom_call.1} parent=1 // pred_check_branch
      %47 = sbr.rel (0) target = $region21
    $region20: #{tpu_custom_call.1} parent=1 // pred_region
      %48 = dma.done [#allocation6], 128
    $region21: #{tpu_custom_call.1} parent=1 // pred_fallthru
      _
    // Predicated region
    $region22: #{tpu_custom_call.1} parent=1 // pred_check
      _
    $region23: #{tpu_custom_call.1} parent=1 // pred_check_branch
      %50 = sbr.rel (0) target = $region25
    $region24: #{tpu_custom_call.1} parent=1 // pred_region
      %51 = dma.done [#allocation6], 256
    $region25: #{tpu_custom_call.1} parent=1 // pred_fallthru
      _
    %v52 = vld [vmem:[#allocation5] sm:$0xff]
    %v53 = vld [vmem:[#allocation2] sm:$0xff]
    %v54 = vsub.f32 %v52, %v53
    %v55 = vld [vmem:[#allocation7] sm:$0xff]
    %v56 = vld [vmem:[#allocation7 + $0x8] sm:$0xff]
    %vm57 = vcmask 130048
    %v59 = vsel %vm57, %v54, 0
    %61 = vmatprep.subr.mxu0 0.0
    %62 = vmatpush1.msra.mxu0 %v55
    %63 = vmatprep.subr.mxu0 0.0
    %64 = vmatpush1.msra.mxu0 %v56
    %65 = vmatprep.subr.mxu0 0.0
    %66 = vmatpush1.msra.mxu0 0.0
    %67 = vmatprep.subr.mxu0 0.0
    %68 = vmatpush1.msra.mxu0 0.0
    %69 = vmatprep.subr.mxu0 0.0
    %70 = vmatpush1.msra.mxu0 0.0
    %71 = vmatprep.subr.mxu0 0.0
    %72 = vmatpush1.msra.mxu0 0.0
    %73 = vmatprep.subr.mxu0 0.0
    %74 = vmatpush1.msra.mxu0 0.0
    %75 = vmatprep.subr.mxu0 0.0
    %76 = vmatpush1.msra.mxu0 0.0
    %77 = vmatprep.subr.mxu0 0.0
    %78 = vmatpush1.msra.mxu0 0.0
    %79 = vmatprep.subr.mxu0 0.0
    %80 = vmatpush1.msra.mxu0 0.0
    %81 = vmatprep.subr.mxu0 0.0
    %82 = vmatpush1.msra.mxu0 0.0
    %83 = vmatprep.subr.mxu0 0.0
    %84 = vmatpush1.msra.mxu0 0.0
    %85 = vmatprep.subr.mxu0 0.0
    %86 = vmatpush1.msra.mxu0 0.0
    %87 = vmatprep.subr.mxu0 0.0
    %88 = vmatpush1.msra.mxu0 0.0
    %89 = vmatprep.subr.mxu0 0.0
    %90 = vmatpush1.msra.mxu0 0.0
    %91 = vmatprep.subr.mxu0 0.0
    %92 = vmatpush1.msra.mxu0 0.0
    %93 = vmatprep.subr.mxu0 0.0
    %94 = vmatpush1.msra.mxu0 0.0
    %95 = vmatprep.subr.mxu0 0.0
    %96 = vmatpush1.msra.mxu0 0.0
    %97 = vmatprep.subr.mxu0 0.0
    %98 = vmatpush1.msra.mxu0 0.0
    %99 = vmatprep.subr.mxu0 0.0
    %100 = vmatpush1.msra.mxu0 0.0
    %101 = vmatprep.subr.mxu0 0.0
    %102 = vmatpush1.msra.mxu0 0.0
    %103 = vmatprep.subr.mxu0 0.0
    %104 = vmatpush1.msra.mxu0 0.0
    %105 = vmatprep.subr.mxu0 0.0
    %106 = vmatpush1.msra.mxu0 0.0
    %107 = vmatprep.subr.mxu0 0.0
    %108 = vmatpush1.msra.mxu0 0.0
    %109 = vmatprep.subr.mxu0 0.0
    %110 = vmatpush1.msra.mxu0 0.0
    %111 = vmatprep.subr.mxu0 0.0
    %112 = vmatpush1.msra.mxu0 0.0
    %113 = vmatprep.subr.mxu0 0.0
    %114 = vmatpush1.msra.mxu0 0.0
    %115 = vmatprep.subr.mxu0 0.0
    %116 = vmatpush1.msra.mxu0 0.0
    %117 = vmatprep.subr.mxu0 0.0
    %118 = vmatpush1.msra.mxu0 0.0
    %119 = vmatprep.subr.mxu0 0.0
    %120 = vmatpush1.msra.mxu0 0.0
    %121 = vmatprep.subr.mxu0 0.0
    %122 = vmatpush1.msra.mxu0 0.0
    %123 = vmatprep.subr.mxu0 0.0
    %124 = vmatpush1.msra.mxu0 0.0
    %125 = vmatprep.mubr.f32.mxu0 0.0
    %126 = vmatmul.mubr.f32.gmra.mrb[0].mxu0 %v59
    %v127 = vpop.f32.mrb[0].mxu0
    %v128 = vadd.f32 0.0, %v127
    %v129 = vpop.f32.mrb[0].mxu0
    %130 = vdwg.mxu0
    %v131 = vmul.f32 %v128, %v128
    %v132 = vsel %vm57, %v131, 0.0
    %133 = vadd.xlane.f32.xlu0 %v132
    %v134 = vpop.xlane.xlu0 %133
    %v135 = vrot.slane %v134, 4
    %v136 = vadd.f32 %v134, %v135
    %v137 = vrot.slane %v136, 2
    %v138 = vadd.f32 %v136, %v137
    %v139 = vrot.slane %v138, 1
    %v140 = vadd.f32 %v138, %v139
    %s141 = vtos %v140
    %s142 = scalar_lea.smem [#allocation8], 0
    %143 = sst [smem:[%s142]] %s141
    // Predicated region
    $region26: #{tpu_custom_call.1} parent=1 // pred_check
      _
    $region27: #{tpu_custom_call.1} parent=1 // pred_check_branch
      %145 = sbr.rel (0) target = $region29
    $region28: #{tpu_custom_call.1} parent=1 // pred_region
      %s147 = ssub.s32 16, 16
      %148 = vsyncadd [#allocation4], %s147
      %151 = dma.smem_to_hbm [#allocation8], 16, %s3, [#allocation4]
    $region29: #{tpu_custom_call.1} parent=1 // pred_fallthru
      _
    // Predicated region
    $region30: #{tpu_custom_call.1} parent=1 // pred_check
      _
    $region31: #{tpu_custom_call.1} parent=1 // pred_check_branch
      %153 = sbr.rel (0) target = $region33
    $region32: #{tpu_custom_call.1} parent=1 // pred_region
      %154 = dma.done [#allocation4], 16
    $region33: #{tpu_custom_call.1} parent=1 // pred_fallthru
      _
    %155 = sfence
    %156 = vsyncpa [#allocation3], 1
    %157 = vsyncpa [#allocation6], 1
    %158 = vsyncpa [#allocation4], 1

</llo_original>
